<compile_context>
chip_gen: v5e
topology: v5e:2x2
jax: 0.10.0
libtpu: 0.0.40
codegen_flags: <defaults>
</compile_context>

<pallas_src>
import functools

import jax
import jax.numpy as jnp
from jax.experimental import pallas as pl
from jax.experimental.pallas import tpu as pltpu


def _round_up(x, m):
    return ((x + m - 1) // m) * m


def _hybrid_kernel(x_ref, p_ref, out_ref, *, kp, hp, b_tile):
    # Parameter slab layout (rows), all bf16:
    #   [0,        kp)         fused first-layer weight   (kp, hp)
    #   [kp,       kp+hp)      second-layer weight        (hp, hp)
    #   [kp+hp,    kp+2*hp)    output-layer weight        (hp, hp)  (col 0 real)
    #   [kp+2*hp,  kp+2*hp+8)  biases: row0 = b1_fused, row1 = b2, row2 = b3
    f32 = jnp.float32
    bf16 = jnp.bfloat16

    x = x_ref[...]                                     # (b_tile, kp) bf16
    w1 = p_ref[pl.ds(0, kp), :]
    w2 = p_ref[pl.ds(kp, hp), :]
    w3 = p_ref[pl.ds(kp + hp, hp), :]
    biases = p_ref[pl.ds(kp + 2 * hp, 8), :].astype(f32)
    b1 = biases[0:1, :]
    b2 = biases[1:2, :]
    b3 = biases[2:3, :]

    # Three MXU matmuls: bf16 operands, f32 accumulation; bias-add/ReLU in f32.
    h1 = jnp.maximum(jnp.dot(x, w1, preferred_element_type=f32) + b1, 0.0)
    h2 = jnp.maximum(jnp.dot(h1.astype(bf16), w2, preferred_element_type=f32) + b2, 0.0)
    out = jnp.dot(h2.astype(bf16), w3, preferred_element_type=f32) + b3   # (b_tile, hp) f32

    # Epilogue: only column 0 is real.  Pack 128 batch scalars per lane-dense
    # output row (one 128x128 XLU transpose per chunk; XLU is otherwise idle),
    # cutting the output HBM writeback by ~128x vs the naive (b_tile, 128) block.
    nb = b_tile // 128
    for r in range(nb):                                # static unrolled, nb <= 16
        blk = out[r * 128:(r + 1) * 128, :]            # (128, hp)
        out_ref[r:r + 1, :] = blk.T[0:1, :]            # row 0 of blk.T == column 0 of blk


def pack_params(weight, bias, w1, b1, w2, b2, w3, b3):
    """Fuse the Bayesian reduction into Linear1 and pack all parameters into one
    lane-aligned bf16 slab.  For static weights, call once and reuse the slab
    across forward calls (hoists the outer product / pads / concat out of the
    per-call path)."""
    f32 = jnp.float32
    weight = jnp.asarray(weight, f32).reshape(-1)              # (D,)
    bias = jnp.asarray(bias, f32).reshape(())
    w1 = jnp.asarray(w1, f32)                                  # (S, H)
    b1 = jnp.asarray(b1, f32).reshape(1, -1)
    w2 = jnp.asarray(w2, f32)                                  # (H, H2)
    b2 = jnp.asarray(b2, f32).reshape(1, -1)
    w3 = jnp.asarray(w3, f32)                                  # (H2, 1)
    b3 = jnp.asarray(b3, f32).reshape(1, -1)

    S, H = w1.shape
    D = weight.shape[0]
    H2 = w2.shape[1]
    K = S * D
    KP = _round_up(max(K, 128), 128)
    HP = _round_up(max(H, H2, 128), 128)

    # Fusion algebra:  Wf[s*D+d, h] = weight[d] * W1[s, h]
    #                  bf[h]        = b1[h] + bias * sum_s W1[s, h]
    wf = (w1[:, None, :] * weight[None, :, None]).reshape(K, H)
    bfuse = b1 + bias * jnp.sum(w1, axis=0, keepdims=True)

    def pad2(a, rows, cols):
        return jnp.pad(a, ((0, rows - a.shape[0]), (0, cols - a.shape[1])))

    params = jnp.concatenate([
        pad2(wf, KP, HP),
        pad2(w2, HP, HP),
        pad2(w3, HP, HP),
        pad2(bfuse, 1, HP),
        pad2(b2, 1, HP),
        pad2(b3, 1, HP),
        jnp.zeros((5, HP), f32),
    ], axis=0).astype(jnp.bfloat16)                            # (KP + 2*HP + 8, HP)
    return params


def hybrid_forward_packed(x, params):
    """x: (B, S, D) f32 with S == D.  params: slab from pack_params (bf16)."""
    B, S, D = x.shape
    assert S == D, "HybridModel requires seq == input_dim (Linear1 consumes the Bayesian output)."
    K = S * D
    HP = params.shape[1]
    p_rows = params.shape[0]
    KP = p_rows - 2 * HP - 8

    # Batch tiling: large tiles amortize per-step overhead; for large B keep
    # >= 2 balanced 1024/2048-row steps so the "parallel" axis spans both v7x
    # TensorCores.  Tiles are multiples of 128 so the packed-output block keeps
    # its sublane dim a multiple of 8.
    if B > 2048:
        b_tile = 2048 if (_round_up(B, 2048) - B) <= 512 else 1024
    else:
        b_tile = _round_up(max(B, 1), 128)
    b_pad = _round_up(B, b_tile)
    grid = b_pad // b_tile
    nb = b_tile // 128

    # bf16 activation stream (halves the dominant HBM read).  Cast BEFORE any
    # pad so the pad copy (when needed at all) writes bf16; skip the pad when
    # the shapes already divide.
    x2 = x.reshape(B, K).astype(jnp.bfloat16)
    if b_pad != B or KP != K:
        x2 = jnp.pad(x2, ((0, b_pad - B), (0, KP - K)))

    kernel = functools.partial(_hybrid_kernel, kp=KP, hp=HP, b_tile=b_tile)
    out = pl.pallas_call(
        kernel,
        out_shape=jax.ShapeDtypeStruct((grid * nb, 128), jnp.float32),
        grid=(grid,),
        in_specs=[
            pl.BlockSpec((b_tile, KP), lambda i: (i, 0)),
            # Constant index_map -> slab DMA'd once and kept resident.
            # TODO(synk): pipeline_mode=pl.Buffered(1) would drop its second
            # ~130 KiB buffer; skipped since VMEM is nowhere near any limit here.
            pl.BlockSpec((p_rows, HP), lambda i: (0, 0)),
        ],
        out_specs=pl.BlockSpec((nb, 128), lambda i: (i, 0)),
        compiler_params=pltpu.CompilerParams(dimension_semantics=("parallel",)),
    )(x2, params)

    # Packed layout: flattened row-major order == batch order; only first B real.
    return out.reshape(-1)[:B].reshape(B, 1)


def hybrid_forward(x, weight, bias, w1, b1, w2, b2, w3, b3):
    """Convenience wrapper matching the original parameter list."""
    return hybrid_forward_packed(x, pack_params(weight, bias, w1, b1, w2, b2, w3, b3))


if __name__ == "__main__":
    key = jax.random.PRNGKey(0)
    D, H = 16, 32                # input_dim, hidden_dim
    S = D                        # required so Linear(input_dim, ...) accepts the Bayesian output

    k = jax.random.split(key, 9)

    # BayesianRegression parameters (as in __init__) plus a deterministic
    # reparameterised draw standing in for pyro.sample(Normal(mean, scale)).
    weight_mean = jnp.zeros((D,), jnp.float32)
    weight_scale = jnp.ones((D,), jnp.float32)
    bias_mean = jnp.zeros((1,), jnp.float32)
    bias_scale = jnp.ones((1,), jnp.float32)
    # TODO(synk): pyro.sample is a stochastic effectful op; we use a fixed-seed
    # reparameterised sample (mean + scale * eps) computed in JAX glue.
    weight = weight_mean + weight_scale * jax.random.normal(k[1], (D,), jnp.float32)
    bias = bias_mean + bias_scale * jax.random.normal(k[2], (1,), jnp.float32)

    # DeepNeuralNetwork Linear layers, PyTorch-default uniform init, stored (in, out).
    def linear_init(kw, kb, fan_in, fan_out):
        bound = 1.0 / float(fan_in) ** 0.5
        w = jax.random.uniform(kw, (fan_in, fan_out), jnp.float32, -bound, bound)
        b = jax.random.uniform(kb, (1, fan_out), jnp.float32, -bound, bound)
        return w, b

    w1, b1 = linear_init(k[3], k[4], D, H)
    w2, b2 = linear_init(k[5], k[6], H, H // 2)
    w3, b3 = linear_init(k[7], k[8], H // 2, 1)

    # Hoisted parameter packing: built once, reused across forward calls.
    params = pack_params(weight, bias, w1, b1, w2, b2, w3, b3)
    forward = jax.jit(hybrid_forward_packed)

    def reference(xr):
        y = jnp.einsum('bsd,d->bs', xr, weight) + bias[0]
        a1 = jnp.maximum(y @ w1 + b1, 0.0)
        a2 = jnp.maximum(a1 @ w2 + b2, 0.0)
        return a2 @ w3 + b3

    # Small batch, plus a ragged multi-chunk batch (exercises the packed epilogue).
    for B in (4, 300):
        x = jax.random.normal(jax.random.fold_in(key, B), (B, S, D), jnp.float32)
        out = forward(x, params)
        jax.block_until_ready(out)
        ref = reference(x)
        assert out.shape == (B, 1), out.shape
        # bf16 activations/weights with f32 accumulation -> loosened tolerance
        # vs the pure-f32 reference (expected error is ~1e-2 absolute here).
        assert jnp.allclose(out, ref, atol=3e-2, rtol=3e-2), (
            B, float(jnp.max(jnp.abs(out - ref))))

    print("KERNEL_OK")
</pallas_src>

<mosaic_0001>
module attributes {stable_mosaic.version = 11 : i64} {
  func.func @_hybrid_kernel(%arg0: i32, %arg1: memref<128x256xbf16, #tpu.memory_space<vmem>>, %arg2: memref<520x128xbf16, #tpu.memory_space<vmem>>, %arg3: memref<1x128xf32, #tpu.memory_space<vmem>>) attributes {dimension_semantics = [#tpu.dimension_semantics<parallel>], iteration_bounds = array<i64: 1>, scalar_prefetch = 0 : i64, scratch_operands = 0 : i64, tpu.core_type = #tpu.core_type<tc>, window_params = [{transform_indices = @transform_0, window_bounds = array<i64: 128, 256>}, {pipeline_mode = #tpu.pipeline_mode<synchronous>, transform_indices = @transform_1, window_bounds = array<i64: 520, 128>}, {transform_indices = @transform_2, window_bounds = array<i64: 1, 128>}]} {
    %c0 = arith.constant 0 : index
    %c0_0 = arith.constant 0 : index
    %0 = vector.load %arg1[%c0, %c0_0] : memref<128x256xbf16, #tpu.memory_space<vmem>>, vector<128x256xbf16>
    %c0_1 = arith.constant 0 : index
    %c0_2 = arith.constant 0 : index
    %1 = vector.load %arg2[%c0_1, %c0_2] : memref<520x128xbf16, #tpu.memory_space<vmem>>, vector<256x128xbf16>
    %c256 = arith.constant 256 : index
    %c0_3 = arith.constant 0 : index
    %2 = vector.load %arg2[%c256, %c0_3] : memref<520x128xbf16, #tpu.memory_space<vmem>>, vector<128x128xbf16>
    %c384 = arith.constant 384 : index
    %c0_4 = arith.constant 0 : index
    %3 = vector.load %arg2[%c384, %c0_4] : memref<520x128xbf16, #tpu.memory_space<vmem>>, vector<128x128xbf16>
    %c512 = arith.constant 512 : index
    %c0_5 = arith.constant 0 : index
    %4 = vector.load %arg2[%c512, %c0_5] : memref<520x128xbf16, #tpu.memory_space<vmem>>, vector<8x128xbf16>
    %5 = arith.extf %4 : vector<8x128xbf16> to vector<8x128xf32>
    %6 = vector.extract_strided_slice %5 {offsets = [0, 0], sizes = [1, 128], strides = [1, 1]} : vector<8x128xf32> to vector<1x128xf32>
    %7 = vector.extract_strided_slice %5 {offsets = [1, 0], sizes = [1, 128], strides = [1, 1]} : vector<8x128xf32> to vector<1x128xf32>
    %8 = vector.extract_strided_slice %5 {offsets = [2, 0], sizes = [1, 128], strides = [1, 1]} : vector<8x128xf32> to vector<1x128xf32>
    %cst = arith.constant dense<0.000000e+00> : vector<128x128xf32>
    %9 = tpu.matmul %0, %1, %cst {dimension_numbers = #tpu.dot_dimension_numbers<[1], [0], [0], [1], [0, 0, 1, 1], [], []>} : vector<128x256xbf16>, vector<256x128xbf16>, vector<128x128xf32> -> vector<128x128xf32>
    %10 = vector.broadcast %6 : vector<1x128xf32> to vector<128x128xf32>
    %11 = arith.addf %9, %10 : vector<128x128xf32>
    %cst_6 = arith.constant 0.000000e+00 : f32
    %12 = vector.broadcast %cst_6 : f32 to vector<128x128xf32>
    %13 = arith.maximumf %11, %12 : vector<128x128xf32>
    %14 = arith.truncf %13 : vector<128x128xf32> to vector<128x128xbf16>
    %cst_7 = arith.constant dense<0.000000e+00> : vector<128x128xf32>
    %15 = tpu.matmul %14, %2, %cst_7 {dimension_numbers = #tpu.dot_dimension_numbers<[1], [0], [0], [1], [0, 0, 1, 1], [], []>} : vector<128x128xbf16>, vector<128x128xbf16>, vector<128x128xf32> -> vector<128x128xf32>
    %16 = vector.broadcast %7 : vector<1x128xf32> to vector<128x128xf32>
    %17 = arith.addf %15, %16 : vector<128x128xf32>
    %cst_8 = arith.constant 0.000000e+00 : f32
    %18 = vector.broadcast %cst_8 : f32 to vector<128x128xf32>
    %19 = arith.maximumf %17, %18 : vector<128x128xf32>
    %20 = arith.truncf %19 : vector<128x128xf32> to vector<128x128xbf16>
    %cst_9 = arith.constant dense<0.000000e+00> : vector<128x128xf32>
    %21 = tpu.matmul %20, %3, %cst_9 {dimension_numbers = #tpu.dot_dimension_numbers<[1], [0], [0], [1], [0, 0, 1, 1], [], []>} : vector<128x128xbf16>, vector<128x128xbf16>, vector<128x128xf32> -> vector<128x128xf32>
    %22 = vector.broadcast %8 : vector<1x128xf32> to vector<128x128xf32>
    %23 = arith.addf %21, %22 : vector<128x128xf32>
    %24 = tpu.transpose %23, [1, 0] : vector<128x128xf32> -> vector<128x128xf32>
    %25 = vector.extract_strided_slice %24 {offsets = [0, 0], sizes = [1, 128], strides = [1, 1]} : vector<128x128xf32> to vector<1x128xf32>
    %c0_10 = arith.constant 0 : index
    %c0_11 = arith.constant 0 : index
    %26 = vector.load %arg3[%c0_10, %c0_11] : memref<1x128xf32, #tpu.memory_space<vmem>>, vector<1x128xf32>
    tpu.vector_store %arg3[%c0_10, %c0_11], %25 {strides = array<i32>} : memref<1x128xf32, #tpu.memory_space<vmem>>, vector<1x128xf32>,
    return
  }
  func.func @transform_0(%arg0: i32) -> (i32, i32) {
    %c0_i32 = arith.constant 0 : i32
    %c0_i32_0 = arith.constant 0 : i32
    return %arg0, %c0_i32 : i32, i32
  }
  func.func @transform_1(%arg0: i32) -> (i32, i32) {
    %c0_i32 = arith.constant 0 : i32
    %c0_i32_0 = arith.constant 0 : i32
    %c0_i32_1 = arith.constant 0 : i32
    return %c0_i32, %c0_i32_0 : i32, i32
  }
  func.func @transform_2(%arg0: i32) -> (i32, i32) {
    %c0_i32 = arith.constant 0 : i32
    %c0_i32_0 = arith.constant 0 : i32
    return %arg0, %c0_i32 : i32, i32
  }
}

</mosaic_0001>

<llo_original>
// kernel: hybrid_forward_packed.1
$region0: #{hybrid_forward_packed.1}
  #allocation0 [shape = 'u32[]', space=smem, size = 0x4, offset = 0x4, fixed_abs, tag = 'smem constant byte address 0x4 - core index']
  #allocation1 [shape = 'u32[72,128]{1,0:T(1,128)}', space=vmem, size = 0x9000, scoped, tag = 'internal scratch']
  %s0 = inlined_call_operand.vmem [shape: bf16[128,256], index: 0, kind: input, shape index: {}]
  %s1 = inlined_call_operand.vmem [shape: bf16[520,128], index: 1, kind: input, shape index: {}]
  %s2 = inlined_call_operand.vmem [shape: f32[1,128], index: 2, kind: output, shape index: {}]
  %s3 = sld [smem:[#allocation0]]
  $region18: #{hybrid_forward_packed.1} parent=0
    _
  %s5 = ssub.s32 1, %s3
  %s6 = scalar_select 0, %s5, %s3
  // Predicated region
  $region2: #{hybrid_forward_packed.1} parent=0 // pred_check
    _
  $region3: #{hybrid_forward_packed.1} parent=0 // pred_check_branch
    %8 = sbr.rel (0) target = $region5
  $region4: #{hybrid_forward_packed.1} parent=0 // pred_region
    _
  $region5: #{hybrid_forward_packed.1} parent=0 // pred_fallthru
    _
  // Predicated region
  $region6: #{hybrid_forward_packed.1} parent=0 // pred_check
    _
  $region7: #{hybrid_forward_packed.1} parent=0 // pred_check_branch
    %10 = sbr.rel (0) target = $region9
  $region8: #{hybrid_forward_packed.1} parent=0 // pred_region
    _
  $region9: #{hybrid_forward_packed.1} parent=0 // pred_fallthru
    _
  %v11 = vld [vmem:[%s0] sm:$0xff]
  %v12 = vld [vmem:[%s0 + $0x8] sm:$0xff]
  %v13 = vld [vmem:[%s0 + $0x10] sm:$0xff]
  %v14 = vld [vmem:[%s0 + $0x18] sm:$0xff]
  %v15 = vld [vmem:[%s0 + $0x20] sm:$0xff]
  %v16 = vld [vmem:[%s0 + $0x28] sm:$0xff]
  %v17 = vld [vmem:[%s0 + $0x30] sm:$0xff]
  %v18 = vld [vmem:[%s0 + $0x38] sm:$0xff]
  %v19 = vld [vmem:[%s0 + $0x40] sm:$0xff]
  %v20 = vld [vmem:[%s0 + $0x48] sm:$0xff]
  %v21 = vld [vmem:[%s0 + $0x50] sm:$0xff]
  %v22 = vld [vmem:[%s0 + $0x58] sm:$0xff]
  %v23 = vld [vmem:[%s0 + $0x60] sm:$0xff]
  %v24 = vld [vmem:[%s0 + $0x68] sm:$0xff]
  %v25 = vld [vmem:[%s0 + $0x70] sm:$0xff]
  %v26 = vld [vmem:[%s0 + $0x78] sm:$0xff]
  %v27 = vld [vmem:[%s1] sm:$0xf]
  %v28 = vld [vmem:[%s1 + $0x4] sm:$0xf]
  %v29 = vld [vmem:[%s1 + $0x8] sm:$0xf]
  %v30 = vld [vmem:[%s1 + $0xc] sm:$0xf]
  %v31 = vld [vmem:[%s1 + $0x10] sm:$0xf]
  %v32 = vld [vmem:[%s1 + $0x14] sm:$0xf]
  %v33 = vld [vmem:[%s1 + $0x18] sm:$0xf]
  %v34 = vld [vmem:[%s1 + $0x1c] sm:$0xf]
  %v35 = vld [vmem:[%s1 + $0x20] sm:$0xf]
  %v36 = vld [vmem:[%s1 + $0x24] sm:$0xf]
  %v37 = vld [vmem:[%s1 + $0x28] sm:$0xf]
  %v38 = vld [vmem:[%s1 + $0x2c] sm:$0xf]
  %v39 = vld [vmem:[%s1 + $0x30] sm:$0xf]
  %v40 = vld [vmem:[%s1 + $0x34] sm:$0xf]
  %v41 = vld [vmem:[%s1 + $0x38] sm:$0xf]
  %v42 = vld [vmem:[%s1 + $0x3c] sm:$0xf]
  %v43 = vld [vmem:[%s1 + $0x40] sm:$0xf]
  %v44 = vld [vmem:[%s1 + $0x44] sm:$0xf]
  %v45 = vld [vmem:[%s1 + $0x48] sm:$0xf]
  %v46 = vld [vmem:[%s1 + $0x4c] sm:$0xf]
  %v47 = vld [vmem:[%s1 + $0x50] sm:$0xf]
  %v48 = vld [vmem:[%s1 + $0x54] sm:$0xf]
  %v49 = vld [vmem:[%s1 + $0x58] sm:$0xf]
  %v50 = vld [vmem:[%s1 + $0x5c] sm:$0xf]
  %v51 = vld [vmem:[%s1 + $0x60] sm:$0xf]
  %v52 = vld [vmem:[%s1 + $0x64] sm:$0xf]
  %v53 = vld [vmem:[%s1 + $0x68] sm:$0xf]
  %v54 = vld [vmem:[%s1 + $0x6c] sm:$0xf]
  %v55 = vld [vmem:[%s1 + $0x70] sm:$0xf]
  %v56 = vld [vmem:[%s1 + $0x74] sm:$0xf]
  %v57 = vld [vmem:[%s1 + $0x78] sm:$0xf]
  %v58 = vld [vmem:[%s1 + $0x7c] sm:$0xf]
  %v59 = vld [vmem:[%s1 + $0x80] sm:$0xf]
  %v60 = vld [vmem:[%s1 + $0x84] sm:$0xf]
  %v61 = vld [vmem:[%s1 + $0x88] sm:$0xf]
  %v62 = vld [vmem:[%s1 + $0x8c] sm:$0xf]
  %v63 = vld [vmem:[%s1 + $0x90] sm:$0xf]
  %v64 = vld [vmem:[%s1 + $0x94] sm:$0xf]
  %v65 = vld [vmem:[%s1 + $0x98] sm:$0xf]
  %v66 = vld [vmem:[%s1 + $0x9c] sm:$0xf]
  %v67 = vld [vmem:[%s1 + $0xa0] sm:$0xf]
  %v68 = vld [vmem:[%s1 + $0xa4] sm:$0xf]
  %v69 = vld [vmem:[%s1 + $0xa8] sm:$0xf]
  %v70 = vld [vmem:[%s1 + $0xac] sm:$0xf]
  %v71 = vld [vmem:[%s1 + $0xb0] sm:$0xf]
  %v72 = vld [vmem:[%s1 + $0xb4] sm:$0xf]
  %v73 = vld [vmem:[%s1 + $0xb8] sm:$0xf]
  %v74 = vld [vmem:[%s1 + $0xbc] sm:$0xf]
  %v75 = vld [vmem:[%s1 + $0xc0] sm:$0xf]
  %v76 = vld [vmem:[%s1 + $0xc4] sm:$0xf]
  %v77 = vld [vmem:[%s1 + $0xc8] sm:$0xf]
  %v78 = vld [vmem:[%s1 + $0xcc] sm:$0xf]
  %v79 = vld [vmem:[%s1 + $0xd0] sm:$0xf]
  %v80 = vld [vmem:[%s1 + $0xd4] sm:$0xf]
  %v81 = vld [vmem:[%s1 + $0xd8] sm:$0xf]
  %v82 = vld [vmem:[%s1 + $0xdc] sm:$0xf]
  %v83 = vld [vmem:[%s1 + $0xe0] sm:$0xf]
  %v84 = vld [vmem:[%s1 + $0xe4] sm:$0xf]
  %v85 = vld [vmem:[%s1 + $0xe8] sm:$0xf]
  %v86 = vld [vmem:[%s1 + $0xec] sm:$0xf]
  %v87 = vld [vmem:[%s1 + $0xf0] sm:$0xf]
  %v88 = vld [vmem:[%s1 + $0xf4] sm:$0xf]
  %v89 = vld [vmem:[%s1 + $0xf8] sm:$0xf]
  %v90 = vld [vmem:[%s1 + $0xfc] sm:$0xf]
  %v91 = vld [vmem:[%s1 + $0x100] sm:$0xf]
  %v92 = vunpack.c.l.bf16 %v91
  %v93 = vperm.slane %v92, 0
  %v110 = vunpack.c.l.b16 %v11
  %v111 = vunpack.c.h.b16 %v11
  %v112 = vunpack.c.l.b16 %v12
  %v113 = vunpack.c.h.b16 %v12
  %v114 = vunpack.c.l.b16 %v13
  %v115 = vunpack.c.h.b16 %v13
  %v116 = vunpack.c.l.b16 %v14
  %v117 = vunpack.c.h.b16 %v14
  %v118 = vunpack.c.l.b16 %v15
  %v119 = vunpack.c.h.b16 %v15
  %v120 = vunpack.c.l.b16 %v16
  %v121 = vunpack.c.h.b16 %v16
  %v122 = vunpack.c.l.b16 %v17
  %v123 = vunpack.c.h.b16 %v17
  %v124 = vunpack.c.l.b16 %v18
  %v125 = vunpack.c.h.b16 %v18
  %v126 = vunpack.c.l.b16 %v19
  %v127 = vunpack.c.h.b16 %v19
  %v128 = vunpack.c.l.b16 %v20
  %v129 = vunpack.c.h.b16 %v20
  %v130 = vunpack.c.l.b16 %v21
  %v131 = vunpack.c.h.b16 %v21
  %v132 = vunpack.c.l.b16 %v22
  %v133 = vunpack.c.h.b16 %v22
  %v134 = vunpack.c.l.b16 %v23
  %v135 = vunpack.c.h.b16 %v23
  %v136 = vunpack.c.l.b16 %v24
  %v137 = vunpack.c.h.b16 %v24
  %v138 = vunpack.c.l.b16 %v25
  %v139 = vunpack.c.h.b16 %v25
  %v140 = vunpack.c.l.b16 %v26
  %v141 = vunpack.c.h.b16 %v26
  %v142 = vpack.c.b16 %v112, %v110
  %v143 = vpack.c.b16 %v113, %v111
  %v144 = vpack.c.b16 %v116, %v114
  %v145 = vpack.c.b16 %v117, %v115
  %v146 = vpack.c.b16 %v120, %v118
  %v147 = vpack.c.b16 %v121, %v119
  %v148 = vpack.c.b16 %v124, %v122
  %v149 = vpack.c.b16 %v125, %v123
  %v150 = vpack.c.b16 %v128, %v126
  %v151 = vpack.c.b16 %v129, %v127
  %v152 = vpack.c.b16 %v132, %v130
  %v153 = vpack.c.b16 %v133, %v131
  %v154 = vpack.c.b16 %v136, %v134
  %v155 = vpack.c.b16 %v137, %v135
  %v156 = vpack.c.b16 %v140, %v138
  %v157 = vpack.c.b16 %v141, %v139
  %v206 = vunpack.c.l.b16 %v27
  %v207 = vunpack.c.l.b16 %v28
  %v208 = vunpack.c.l.b16 %v29
  %v209 = vunpack.c.l.b16 %v30
  %v210 = vunpack.c.l.b16 %v31
  %v211 = vunpack.c.l.b16 %v32
  %v212 = vunpack.c.l.b16 %v33
  %v213 = vunpack.c.l.b16 %v34
  %v214 = vunpack.c.l.b16 %v35
  %v215 = vunpack.c.l.b16 %v36
  %v216 = vunpack.c.l.b16 %v37
  %v217 = vunpack.c.l.b16 %v38
  %v218 = vunpack.c.l.b16 %v39
  %v219 = vunpack.c.l.b16 %v40
  %v220 = vunpack.c.l.b16 %v41
  %v221 = vunpack.c.l.b16 %v42
  %v222 = vunpack.c.l.b16 %v43
  %v223 = vunpack.c.l.b16 %v44
  %v224 = vunpack.c.l.b16 %v45
  %v225 = vunpack.c.l.b16 %v46
  %v226 = vunpack.c.l.b16 %v47
  %v227 = vunpack.c.l.b16 %v48
  %v228 = vunpack.c.l.b16 %v49
  %v229 = vunpack.c.l.b16 %v50
  %v230 = vunpack.c.l.b16 %v51
  %v231 = vunpack.c.l.b16 %v52
  %v232 = vunpack.c.l.b16 %v53
  %v233 = vunpack.c.l.b16 %v54
  %v234 = vunpack.c.l.b16 %v55
  %v235 = vunpack.c.l.b16 %v56
  %v236 = vunpack.c.l.b16 %v57
  %v237 = vunpack.c.l.b16 %v58
  %v238 = vpack.c.b16 %v207, %v206
  %v239 = vpack.c.b16 %v209, %v208
  %v240 = vpack.c.b16 %v211, %v210
  %v241 = vpack.c.b16 %v213, %v212
  %v242 = vpack.c.b16 %v215, %v214
  %v243 = vpack.c.b16 %v217, %v216
  %v244 = vpack.c.b16 %v219, %v218
  %v245 = vpack.c.b16 %v221, %v220
  %v246 = vpack.c.b16 %v223, %v222
  %v247 = vpack.c.b16 %v225, %v224
  %v248 = vpack.c.b16 %v227, %v226
  %v249 = vpack.c.b16 %v229, %v228
  %v250 = vpack.c.b16 %v231, %v230
  %v251 = vpack.c.b16 %v233, %v232
  %v252 = vpack.c.b16 %v235, %v234
  %v253 = vpack.c.b16 %v237, %v236
  %270 = vmatpush.bf16.msra.mxu0 %v245
  %271 = vmatpush.bf16.msra.mxu0 %v244
  %272 = vmatpush.bf16.msra.mxu0 %v243
  %273 = vmatpush.bf16.msra.mxu0 %v242
  %274 = vmatpush.bf16.msra.mxu0 %v241
  %275 = vmatpush.bf16.msra.mxu0 %v240
  %276 = vmatpush.bf16.msra.mxu0 %v239
  %277 = vmatpush.bf16.msra.mxu0 %v238
  %278 = vmatmul.bf16.gmra.mxu0 %v142
  %v279 = vpop.f32.mrf.mxu0
  %v280 = vadd.f32 %v93, %v279
  %v281 = vpop.f32.mrf.mxu0
  %v282 = vadd.f32 %v93, %v281
  %283 = vmatmul.bf16.gmra.mxu0 %v144
  %v284 = vpop.f32.mrf.mxu0
  %v285 = vadd.f32 %v93, %v284
  %v286 = vpop.f32.mrf.mxu0
  %v287 = vadd.f32 %v93, %v286
  %288 = vmatmul.bf16.gmra.mxu0 %v146
  %v289 = vpop.f32.mrf.mxu0
  %v290 = vadd.f32 %v93, %v289
  %v291 = vpop.f32.mrf.mxu0
  %v292 = vadd.f32 %v93, %v291
  %293 = vmatmul.bf16.gmra.mxu0 %v148
  %v294 = vpop.f32.mrf.mxu0
  %v295 = vadd.f32 %v93, %v294
  %v296 = vpop.f32.mrf.mxu0
  %v297 = vadd.f32 %v93, %v296
  %298 = vmatmul.bf16.gmra.mxu0 %v150
  %v299 = vpop.f32.mrf.mxu0
  %v300 = vadd.f32 %v93, %v299
  %v301 = vpop.f32.mrf.mxu0
  %v302 = vadd.f32 %v93, %v301
  %303 = vmatmul.bf16.gmra.mxu0 %v152
  %v304 = vpop.f32.mrf.mxu0
  %v305 = vadd.f32 %v93, %v304
  %v306 = vpop.f32.mrf.mxu0
  %v307 = vadd.f32 %v93, %v306
  %308 = vmatmul.bf16.gmra.mxu0 %v154
  %v309 = vpop.f32.mrf.mxu0
  %v310 = vadd.f32 %v93, %v309
  %v311 = vpop.f32.mrf.mxu0
  %v312 = vadd.f32 %v93, %v311
  %313 = vmatmul.bf16.gmra.mxu0 %v156
  %v314 = vpop.f32.mrf.mxu0
  %v315 = vadd.f32 %v93, %v314
  %v316 = vpop.f32.mrf.mxu0
  %v317 = vadd.f32 %v93, %v316
  %318 = vdwg.mxu0
  %319 = vmatpush.bf16.msra.mxu0 %v253
  %320 = vmatpush.bf16.msra.mxu0 %v252
  %321 = vmatpush.bf16.msra.mxu0 %v251
  %322 = vmatpush.bf16.msra.mxu0 %v250
  %323 = vmatpush.bf16.msra.mxu0 %v249
  %324 = vmatpush.bf16.msra.mxu0 %v248
  %325 = vmatpush.bf16.msra.mxu0 %v247
  %326 = vmatpush.bf16.msra.mxu0 %v246
  %327 = vmatmul.bf16.gmra.mxu0 %v143
  %v328 = vpop.f32.mrf.mxu0
  %v329 = vadd.f32 %v280, %v328
  %v330 = vpop.f32.mrf.mxu0
  %v331 = vadd.f32 %v282, %v330
  %332 = vmatmul.bf16.gmra.mxu0 %v145
  %v333 = vpop.f32.mrf.mxu0
  %v334 = vadd.f32 %v285, %v333
  %v335 = vpop.f32.mrf.mxu0
  %v336 = vadd.f32 %v287, %v335
  %337 = vmatmul.bf16.gmra.mxu0 %v147
  %v338 = vpop.f32.mrf.mxu0
  %v339 = vadd.f32 %v290, %v338
  %v340 = vpop.f32.mrf.mxu0
  %v341 = vadd.f32 %v292, %v340
  %342 = vmatmul.bf16.gmra.mxu0 %v149
  %v343 = vpop.f32.mrf.mxu0
  %v344 = vadd.f32 %v295, %v343
  %v345 = vpop.f32.mrf.mxu0
  %v346 = vadd.f32 %v297, %v345
  %347 = vmatmul.bf16.gmra.mxu0 %v151
  %v348 = vpop.f32.mrf.mxu0
  %v349 = vadd.f32 %v300, %v348
  %v350 = vpop.f32.mrf.mxu0
  %v351 = vadd.f32 %v302, %v350
  %352 = vmatmul.bf16.gmra.mxu0 %v153
  %v353 = vpop.f32.mrf.mxu0
  %v354 = vadd.f32 %v305, %v353
  %v355 = vpop.f32.mrf.mxu0
  %v356 = vadd.f32 %v307, %v355
  %357 = vmatmul.bf16.gmra.mxu0 %v155
  %v358 = vpop.f32.mrf.mxu0
  %v359 = vadd.f32 %v310, %v358
  %v360 = vpop.f32.mrf.mxu0
  %v361 = vadd.f32 %v312, %v360
  %362 = vmatmul.bf16.gmra.mxu0 %v157
  %v363 = vpop.f32.mrf.mxu0
  %v364 = vadd.f32 %v315, %v363
  %v365 = vpop.f32.mrf.mxu0
  %v366 = vadd.f32 %v317, %v365
  %367 = vdwg.mxu0
  %v368 = vmax.f32 %v329, 0.0
  %v369 = vmax.f32 %v331, 0.0
  %v370 = vmax.f32 %v334, 0.0
  %v371 = vmax.f32 %v336, 0.0
  %v372 = vmax.f32 %v339, 0.0
  %v373 = vmax.f32 %v341, 0.0
  %v374 = vmax.f32 %v344, 0.0
  %v375 = vmax.f32 %v346, 0.0
  %v376 = vmax.f32 %v349, 0.0
  %v377 = vmax.f32 %v351, 0.0
  %v378 = vmax.f32 %v354, 0.0
  %v379 = vmax.f32 %v356, 0.0
  %v380 = vmax.f32 %v359, 0.0
  %v381 = vmax.f32 %v361, 0.0
  %v382 = vmax.f32 %v364, 0.0
  %v383 = vmax.f32 %v366, 0.0
  %v384 = vpack.c.bf16 %v369, %v368
  %v385 = vpack.c.bf16 %v371, %v370
  %v386 = vpack.c.bf16 %v373, %v372
  %v387 = vpack.c.bf16 %v375, %v374
  %v388 = vpack.c.bf16 %v377, %v376
  %v389 = vpack.c.bf16 %v379, %v378
  %v390 = vpack.c.bf16 %v381, %v380
  %v391 = vpack.c.bf16 %v383, %v382
  %v392 = vperm.slane %v92, 1
  %v409 = vunpack.c.l.b16 %v59
  %v410 = vunpack.c.l.b16 %v60
  %v411 = vunpack.c.l.b16 %v61
  %v412 = vunpack.c.l.b16 %v62
  %v413 = vunpack.c.l.b16 %v63
  %v414 = vunpack.c.l.b16 %v64
  %v415 = vunpack.c.l.b16 %v65
  %v416 = vunpack.c.l.b16 %v66
  %v417 = vunpack.c.l.b16 %v67
  %v418 = vunpack.c.l.b16 %v68
  %v419 = vunpack.c.l.b16 %v69
  %v420 = vunpack.c.l.b16 %v70
  %v421 = vunpack.c.l.b16 %v71
  %v422 = vunpack.c.l.b16 %v72
  %v423 = vunpack.c.l.b16 %v73
  %v424 = vunpack.c.l.b16 %v74
  %v425 = vpack.c.b16 %v410, %v409
  %v426 = vpack.c.b16 %v412, %v411
  %v427 = vpack.c.b16 %v414, %v413
  %v428 = vpack.c.b16 %v416, %v415
  %v429 = vpack.c.b16 %v418, %v417
  %v430 = vpack.c.b16 %v420, %v419
  %v431 = vpack.c.b16 %v422, %v421
  %v432 = vpack.c.b16 %v424, %v423
  %441 = vmatpush.bf16.msra.mxu0 %v432
  %442 = vmatpush.bf16.msra.mxu0 %v431
  %443 = vmatpush.bf16.msra.mxu0 %v430
  %444 = vmatpush.bf16.msra.mxu0 %v429
  %445 = vmatpush.bf16.msra.mxu0 %v428
  %446 = vmatpush.bf16.msra.mxu0 %v427
  %447 = vmatpush.bf16.msra.mxu0 %v426
  %448 = vmatpush.bf16.msra.mxu0 %v425
  %449 = vmatmul.bf16.gmra.mxu0 %v384
  %v450 = vpop.f32.mrf.mxu0
  %v451 = vadd.f32 %v392, %v450
  %v452 = vpop.f32.mrf.mxu0
  %v453 = vadd.f32 %v392, %v452
  %454 = vmatmul.bf16.gmra.mxu0 %v385
  %v455 = vpop.f32.mrf.mxu0
  %v456 = vadd.f32 %v392, %v455
  %v457 = vpop.f32.mrf.mxu0
  %v458 = vadd.f32 %v392, %v457
  %459 = vmatmul.bf16.gmra.mxu0 %v386
  %v460 = vpop.f32.mrf.mxu0
  %v461 = vadd.f32 %v392, %v460
  %v462 = vpop.f32.mrf.mxu0
  %v463 = vadd.f32 %v392, %v462
  %464 = vmatmul.bf16.gmra.mxu0 %v387
  %v465 = vpop.f32.mrf.mxu0
  %v466 = vadd.f32 %v392, %v465
  %v467 = vpop.f32.mrf.mxu0
  %v468 = vadd.f32 %v392, %v467
  %469 = vmatmul.bf16.gmra.mxu0 %v388
  %v470 = vpop.f32.mrf.mxu0
  %v471 = vadd.f32 %v392, %v470
  %v472 = vpop.f32.mrf.mxu0
  %v473 = vadd.f32 %v392, %v472
  %474 = vmatmul.bf16.gmra.mxu0 %v389
  %v475 = vpop.f32.mrf.mxu0
  %v476 = vadd.f32 %v392, %v475
  %v477 = vpop.f32.mrf.mxu0
  %v478 = vadd.f32 %v392, %v477
  %479 = vmatmul.bf16.gmra.mxu0 %v390
  %v480 = vpop.f32.mrf.mxu0
  %v481 = vadd.f32 %v392, %v480
  %v482 = vpop.f32.mrf.mxu0
  %v483 = vadd.f32 %v392, %v482
  %484 = vmatmul.bf16.gmra.mxu0 %v391
  %v485 = vpop.f32.mrf.mxu0
  %v486 = vadd.f32 %v392, %v485
  %v487 = vpop.f32.mrf.mxu0
  %v488 = vadd.f32 %v392, %v487
  %489 = vdwg.mxu0
  %v490 = vmax.f32 %v451, 0.0
  %v491 = vmax.f32 %v453, 0.0
  %v492 = vmax.f32 %v456, 0.0
  %v493 = vmax.f32 %v458, 0.0
  %v494 = vmax.f32 %v461, 0.0
  %v495 = vmax.f32 %v463, 0.0
  %v496 = vmax.f32 %v466, 0.0
  %v497 = vmax.f32 %v468, 0.0
  %v498 = vmax.f32 %v471, 0.0
  %v499 = vmax.f32 %v473, 0.0
  %v500 = vmax.f32 %v476, 0.0
  %v501 = vmax.f32 %v478, 0.0
  %v502 = vmax.f32 %v481, 0.0
  %v503 = vmax.f32 %v483, 0.0
  %v504 = vmax.f32 %v486, 0.0
  %v505 = vmax.f32 %v488, 0.0
  %v506 = vpack.c.bf16 %v491, %v490
  %v507 = vpack.c.bf16 %v493, %v492
  %v508 = vpack.c.bf16 %v495, %v494
  %v509 = vpack.c.bf16 %v497, %v496
  %v510 = vpack.c.bf16 %v499, %v498
  %v511 = vpack.c.bf16 %v501, %v500
  %v512 = vpack.c.bf16 %v503, %v502
  %v513 = vpack.c.bf16 %v505, %v504
  %v514 = vperm.slane %v92, 2
  %v531 = vunpack.c.l.b16 %v75
  %v532 = vunpack.c.l.b16 %v76
  %v533 = vunpack.c.l.b16 %v77
  %v534 = vunpack.c.l.b16 %v78
  %v535 = vunpack.c.l.b16 %v79
  %v536 = vunpack.c.l.b16 %v80
  %v537 = vunpack.c.l.b16 %v81
  %v538 = vunpack.c.l.b16 %v82
  %v539 = vunpack.c.l.b16 %v83
  %v540 = vunpack.c.l.b16 %v84
  %v541 = vunpack.c.l.b16 %v85
  %v542 = vunpack.c.l.b16 %v86
  %v543 = vunpack.c.l.b16 %v87
  %v544 = vunpack.c.l.b16 %v88
  %v545 = vunpack.c.l.b16 %v89
  %v546 = vunpack.c.l.b16 %v90
  %v547 = vpack.c.b16 %v532, %v531
  %v548 = vpack.c.b16 %v534, %v533
  %v549 = vpack.c.b16 %v536, %v535
  %v550 = vpack.c.b16 %v538, %v537
  %v551 = vpack.c.b16 %v540, %v539
  %v552 = vpack.c.b16 %v542, %v541
  %v553 = vpack.c.b16 %v544, %v543
  %v554 = vpack.c.b16 %v546, %v545
  %563 = vmatpush.bf16.msra.mxu0 %v554
  %564 = vmatpush.bf16.msra.mxu0 %v553
  %565 = vmatpush.bf16.msra.mxu0 %v552
  %566 = vmatpush.bf16.msra.mxu0 %v551
  %567 = vmatpush.bf16.msra.mxu0 %v550
  %568 = vmatpush.bf16.msra.mxu0 %v549
  %569 = vmatpush.bf16.msra.mxu0 %v548
  %570 = vmatpush.bf16.msra.mxu0 %v547
  %571 = vmatmul.bf16.gmra.mxu0 %v506
  %v572 = vpop.f32.mrf.mxu0
  %v573 = vadd.f32 %v514, %v572
  %v574 = vpop.f32.mrf.mxu0
  %v575 = vadd.f32 %v514, %v574
  %576 = vmatmul.bf16.gmra.mxu0 %v507
  %v577 = vpop.f32.mrf.mxu0
  %v578 = vadd.f32 %v514, %v577
  %v579 = vpop.f32.mrf.mxu0
  %v580 = vadd.f32 %v514, %v579
  %581 = vmatmul.bf16.gmra.mxu0 %v508
  %v582 = vpop.f32.mrf.mxu0
  %v583 = vadd.f32 %v514, %v582
  %v584 = vpop.f32.mrf.mxu0
  %v585 = vadd.f32 %v514, %v584
  %586 = vmatmul.bf16.gmra.mxu0 %v509
  %v587 = vpop.f32.mrf.mxu0
  %v588 = vadd.f32 %v514, %v587
  %v589 = vpop.f32.mrf.mxu0
  %v590 = vadd.f32 %v514, %v589
  %591 = vmatmul.bf16.gmra.mxu0 %v510
  %v592 = vpop.f32.mrf.mxu0
  %v593 = vadd.f32 %v514, %v592
  %v594 = vpop.f32.mrf.mxu0
  %v595 = vadd.f32 %v514, %v594
  %596 = vmatmul.bf16.gmra.mxu0 %v511
  %v597 = vpop.f32.mrf.mxu0
  %v598 = vadd.f32 %v514, %v597
  %v599 = vpop.f32.mrf.mxu0
  %v600 = vadd.f32 %v514, %v599
  %601 = vmatmul.bf16.gmra.mxu0 %v512
  %v602 = vpop.f32.mrf.mxu0
  %v603 = vadd.f32 %v514, %v602
  %v604 = vpop.f32.mrf.mxu0
  %v605 = vadd.f32 %v514, %v604
  %606 = vmatmul.bf16.gmra.mxu0 %v513
  %v607 = vpop.f32.mrf.mxu0
  %v608 = vadd.f32 %v514, %v607
  %v609 = vpop.f32.mrf.mxu0
  %v610 = vadd.f32 %v514, %v609
  %611 = vdwg.mxu0
  %612 = vxpose.xlu0.b32.start [1/16] %v573, 128
  %613 = vxpose.xlu0.b32.cont [2/16] %v575, 128
  %614 = vxpose.xlu0.b32.cont [3/16] %v578, 128
  %615 = vxpose.xlu0.b32.cont [4/16] %v580, 128
  %616 = vxpose.xlu0.b32.cont [5/16] %v583, 128
  %617 = vxpose.xlu0.b32.cont [6/16] %v585, 128
  %618 = vxpose.xlu0.b32.cont [7/16] %v588, 128
  %619 = vxpose.xlu0.b32.cont [8/16] %v590, 128
  %620 = vxpose.xlu0.b32.cont [9/16] %v593, 128
  %621 = vxpose.xlu0.b32.cont [10/16] %v595, 128
  %622 = vxpose.xlu0.b32.cont [11/16] %v598, 128
  %623 = vxpose.xlu0.b32.cont [12/16] %v600, 128
  %624 = vxpose.xlu0.b32.cont [13/16] %v603, 128
  %625 = vxpose.xlu0.b32.cont [14/16] %v605, 128
  %626 = vxpose.xlu0.b32.cont [15/16] %v608, 128
  %627 = vxpose.xlu0.b32.end [16/16] %v610, 128
  %v628 = vpop.trf.xlu0
  %v629 = vpop.trf.xlu0
  %v630 = vpop.trf.xlu0
  %v631 = vpop.trf.xlu0
  %v632 = vpop.trf.xlu0
  %v633 = vpop.trf.xlu0
  %v634 = vpop.trf.xlu0
  %v635 = vpop.trf.xlu0
  %v636 = vpop.trf.xlu0
  %v637 = vpop.trf.xlu0
  %v638 = vpop.trf.xlu0
  %v639 = vpop.trf.xlu0
  %v640 = vpop.trf.xlu0
  %v641 = vpop.trf.xlu0
  %v642 = vpop.trf.xlu0
  %v643 = vpop.trf.xlu0
  %644 = vst [vmem:[%s2] sm:$0x1] %v628
  // Predicated region
  $region10: #{hybrid_forward_packed.1} parent=0 // pred_check
    _
  $region11: #{hybrid_forward_packed.1} parent=0 // pred_check_branch
    %646 = sbr.rel (0) target = $region13
  $region12: #{hybrid_forward_packed.1} parent=0 // pred_region
    _
  $region13: #{hybrid_forward_packed.1} parent=0 // pred_fallthru
    _
  // Predicated region
  $region14: #{hybrid_forward_packed.1} parent=0 // pred_check
    _
  $region15: #{hybrid_forward_packed.1} parent=0 // pred_check_branch
    %648 = sbr.rel (0) target = $region17
  $region16: #{hybrid_forward_packed.1} parent=0 // pred_region
    _
  $region17: #{hybrid_forward_packed.1} parent=0 // pred_fallthru
    _

</llo_original>
